<compile_context>
chip_gen: v6e
topology: v6e:2x2x1
jax: 0.10.0
libtpu: 0.0.40
codegen_flags: <defaults>
</compile_context>

<pallas_src>
import functools

import jax
import jax.numpy as jnp
from jax import lax
from jax.experimental import pallas as pl
from jax.experimental.pallas import tpu as pltpu

_EPS = 1e-8  # torch.nn.CosineSimilarity default eps


def _similarity_kernel(x_ref, y_ref, o_ref, *, inv_temp):
    """Compute one (TM, TN) tile of cos(x, y) / temp.

    Each row of x / y is normalized by 1/max(||row||_2, eps) (matching the
    per-vector clamp torch's cosine_similarity applies), with 1/temp folded
    into the x scale, so the output is a single MXU matmul result.
    """
    x = x_ref[...]                                    # (TM, H)
    y = y_ref[...]                                    # (TN, H)

    xf = x.astype(jnp.float32)
    yf = y.astype(jnp.float32)

    # Row-wise squared L2 norms, accumulated in f32 (O((TM+TN)*H) work).
    x_sq = jnp.sum(xf * xf, axis=-1, keepdims=True)   # (TM, 1)
    y_sq = jnp.sum(yf * yf, axis=-1, keepdims=True)   # (TN, 1)

    # rsqrt(max(sq, eps^2)) == 1 / max(||row||, eps); fold 1/temp into x.
    x_scale = lax.rsqrt(jnp.maximum(x_sq, _EPS * _EPS)) * inv_temp
    y_scale = lax.rsqrt(jnp.maximum(y_sq, _EPS * _EPS))

    # Keep bf16 operands native for the MXU; otherwise feed f32.
    dot_dtype = (jnp.bfloat16
                 if (x.dtype == jnp.bfloat16 and y.dtype == jnp.bfloat16)
                 else jnp.float32)
    xn = (xf * x_scale).astype(dot_dtype)
    yn = (yf * y_scale).astype(dot_dtype)

    # Contract the shared feature (lane) axis of both operands directly:
    # no y.T transpose / relayout, output is a pure matmul tile.
    o_ref[...] = lax.dot_general(
        xn, yn,
        dimension_numbers=(((1,), (1,)), ((), ())),
        preferred_element_type=jnp.float32,
    )


def _round_up(n, m):
    return ((n + m - 1) // m) * m


def similarity(x, y, temp, *, tm=256, tn=256):
    """Pallas equivalent of Similarity(temp)(x, y) for x:(Bx,1,H), y:(1,By,H).

    tm/tn default to 256 (safe for v5e/v6e/v7x VMEM limits, lane-dense, and a
    full feed for the 256x256 MXU); raise to 512+ on v6e if desired.
    """
    assert x.ndim == 3 and y.ndim == 3, "expected 3-D broadcastable inputs"
    assert x.shape[1] == 1 and y.shape[0] == 1, "expected (Bx,1,H) and (1,By,H)"
    assert x.shape[-1] == y.shape[-1], "feature dims must match"

    x2 = x[:, 0, :]                 # (Bx, H)
    y2 = y[0, :, :]                 # (By, H)
    Bx, H = x2.shape
    By = y2.shape[0]

    # Sublane-aligned row tiles, lane-dense (multiple-of-128) output columns;
    # capped so tiny batches stay a single block.
    TM = min(tm, _round_up(Bx, 8))
    TN = min(tn, _round_up(By, 128))
    grid = (pl.cdiv(Bx, TM), pl.cdiv(By, TN))

    return pl.pallas_call(
        functools.partial(_similarity_kernel, inv_temp=1.0 / float(temp)),
        grid=grid,
        out_shape=jax.ShapeDtypeStruct((Bx, By), jnp.float32),
        in_specs=[
            pl.BlockSpec((TM, H), lambda i, j: (i, 0)),
            pl.BlockSpec((TN, H), lambda i, j: (j, 0)),
        ],
        out_specs=pl.BlockSpec((TM, TN), lambda i, j: (i, j)),
        compiler_params=pltpu.CompilerParams(
            dimension_semantics=("parallel", "parallel"),
        ),
    )(x2, y2)


def _reference(x, y, temp):
    # Pure-JAX reference matching torch.nn.CosineSimilarity semantics.
    dot = jnp.sum(x * y, axis=-1)
    nx = jnp.sqrt(jnp.sum(x * x, axis=-1))
    ny = jnp.sqrt(jnp.sum(y * y, axis=-1))
    return dot / jnp.maximum(nx * ny, _EPS) / temp


if __name__ == "__main__":
    temp = 0.05  # ECL-style temperature
    key = jax.random.PRNGKey(0)
    kx, ky, kx2, ky2 = jax.random.split(key, 4)

    # --- small single-tile case (ECL usage: z1.unsqueeze(1), z2.unsqueeze(0))
    B, H = 8, 32
    x = jax.random.normal(kx, (B, 1, H), dtype=jnp.float32)
    y = jax.random.normal(ky, (1, B, H), dtype=jnp.float32)

    out = jax.block_until_ready(similarity(x, y, temp))
    ref = _reference(x, y, temp)
    assert out.shape == (B, B), out.shape
    assert jnp.allclose(out, ref, atol=2e-3, rtol=2e-3), (
        "small-case mismatch vs reference: max abs err "
        f"{float(jnp.max(jnp.abs(out - ref)))}"
    )

    # --- multi-tile case exercising the 2-D grid and ragged edge tiles
    Bx, By, H2 = 300, 200, 64
    xb = jax.random.normal(kx2, (Bx, 1, H2), dtype=jnp.float32)
    yb = jax.random.normal(ky2, (1, By, H2), dtype=jnp.float32)

    out_b = jax.block_until_ready(similarity(xb, yb, temp))
    ref_b = _reference(xb, yb, temp)
    assert out_b.shape == (Bx, By), out_b.shape
    assert jnp.allclose(out_b, ref_b, atol=2e-3, rtol=2e-3), (
        "tiled-case mismatch vs reference: max abs err "
        f"{float(jnp.max(jnp.abs(out_b - ref_b)))}"
    )

    print("KERNEL_OK")
</pallas_src>

<mosaic_0001>
module attributes {stable_mosaic.version = 11 : i64} {
  func.func @_similarity_kernel(%arg0: i32, %arg1: i32, %arg2: memref<8x32xf32, #tpu.memory_space<vmem>>, %arg3: memref<128x32xf32, #tpu.memory_space<vmem>>, %arg4: memref<8x128xf32, #tpu.memory_space<vmem>>) attributes {dimension_semantics = [#tpu.dimension_semantics<parallel>, #tpu.dimension_semantics<parallel>], iteration_bounds = array<i64: 1, 1>, scalar_prefetch = 0 : i64, scratch_operands = 0 : i64, tpu.core_type = #tpu.core_type<tc>, window_params = [{transform_indices = @transform_0, window_bounds = array<i64: 8, 32>}, {transform_indices = @transform_1, window_bounds = array<i64: 128, 32>}, {transform_indices = @transform_2, window_bounds = array<i64: 8, 128>}]} {
    %c0 = arith.constant 0 : index
    %c0_0 = arith.constant 0 : index
    %0 = vector.load %arg2[%c0, %c0_0] : memref<8x32xf32, #tpu.memory_space<vmem>>, vector<8x32xf32>
    %c0_1 = arith.constant 0 : index
    %c0_2 = arith.constant 0 : index
    %1 = vector.load %arg3[%c0_1, %c0_2] : memref<128x32xf32, #tpu.memory_space<vmem>>, vector<128x32xf32>
    %2 = arith.mulf %0, %0 : vector<8x32xf32>
    %cst = arith.constant dense<0.000000e+00> : vector<8xf32>
    %3 = vector.multi_reduction <add>, %2, %cst [1] : vector<8x32xf32> to vector<8xf32>
    %4 = vector.shape_cast %3 : vector<8xf32> to vector<8x1xf32>
    %5 = arith.mulf %1, %1 : vector<128x32xf32>
    %cst_3 = arith.constant dense<0.000000e+00> : vector<128xf32>
    %6 = vector.multi_reduction <add>, %5, %cst_3 [1] : vector<128x32xf32> to vector<128xf32>
    %7 = vector.shape_cast %6 : vector<128xf32> to vector<128x1xf32>
    %cst_4 = arith.constant 1.000000e-16 : f32
    %8 = vector.broadcast %cst_4 : f32 to vector<8x1xf32>
    %9 = arith.maximumf %4, %8 : vector<8x1xf32>
    %10 = math.rsqrt %9 : vector<8x1xf32>
    %cst_5 = arith.constant 2.000000e+01 : f32
    %11 = vector.broadcast %cst_5 : f32 to vector<8x1xf32>
    %12 = arith.mulf %10, %11 : vector<8x1xf32>
    %cst_6 = arith.constant 1.000000e-16 : f32
    %13 = vector.broadcast %cst_6 : f32 to vector<128x1xf32>
    %14 = arith.maximumf %7, %13 : vector<128x1xf32>
    %15 = math.rsqrt %14 : vector<128x1xf32>
    %16 = vector.broadcast %12 : vector<8x1xf32> to vector<8x32xf32>
    %17 = arith.mulf %0, %16 : vector<8x32xf32>
    %18 = vector.broadcast %15 : vector<128x1xf32> to vector<128x32xf32>
    %19 = arith.mulf %1, %18 : vector<128x32xf32>
    %cst_7 = arith.constant dense<0.000000e+00> : vector<8x128xf32>
    %20 = tpu.matmul %17, %19, %cst_7 {dimension_numbers = #tpu.dot_dimension_numbers<[1], [1], [0], [0], [0, 0, 1, 0], [], []>} : vector<8x32xf32>, vector<128x32xf32>, vector<8x128xf32> -> vector<8x128xf32>
    %c0_8 = arith.constant 0 : index
    %c0_9 = arith.constant 0 : index
    %21 = vector.load %arg4[%c0_8, %c0_9] : memref<8x128xf32, #tpu.memory_space<vmem>>, vector<8x128xf32>
    tpu.vector_store %arg4[%c0_8, %c0_9], %20 {strides = array<i32>} : memref<8x128xf32, #tpu.memory_space<vmem>>, vector<8x128xf32>,
    return
  }
  func.func @transform_0(%arg0: i32, %arg1: i32) -> (i32, i32) {
    %c0_i32 = arith.constant 0 : i32
    %c0_i32_0 = arith.constant 0 : i32
    return %arg0, %c0_i32 : i32, i32
  }
  func.func @transform_1(%arg0: i32, %arg1: i32) -> (i32, i32) {
    %c0_i32 = arith.constant 0 : i32
    %c0_i32_0 = arith.constant 0 : i32
    return %arg1, %c0_i32 : i32, i32
  }
  func.func @transform_2(%arg0: i32, %arg1: i32) -> (i32, i32) {
    %c0_i32 = arith.constant 0 : i32
    return %arg0, %arg1 : i32, i32
  }
}

</mosaic_0001>

<llo_original>
// kernel: tpu_custom_call.1
$region0: #{tpu_custom_call.1}
  #allocation0 [shape = 'u32[]', space=smem, size = 0x4, offset = 0x4, fixed_abs, tag = 'smem constant byte address 0x4 - core index']
  #allocation1 [shape = 'u32[144,128]{1,0:T(1,128)}', space=vmem, size = 0x12000, scoped, tag = 'internal scratch']
  %s0 = inlined_call_operand.hbm [shape: f32[8,32], index: 0, kind: input, shape index: {}]
  %s1 = inlined_call_operand.hbm [shape: f32[8,32], index: 1, kind: input, shape index: {}]
  %s2 = inlined_call_operand.hbm [shape: f32[8,8], index: 2, kind: output, shape index: {}]
  %s3 = sld [smem:[#allocation0]]
  $region26: #{tpu_custom_call.1} parent=0
    _
  %s5 = ssub.s32 1, %s3
  %s6 = scalar_select 0, %s5, %s3
  $region1: #{tpu_custom_call.1} parent=0
    #allocation2 [shape = 'u8[4096]{0}', space=vmem, size = 0x1000, scoped, tag = 'input window, operand 0, single buffered']
    #allocation3 [shape = 's32[1]{0}', space=sflag, size = 0x4, scoped, tag = 'scoped memory for tpu_custom_call.1']
    #allocation4 [shape = 's32[1]{0}', space=sflag, size = 0x4, scoped, tag = 'scoped memory for tpu_custom_call.1']
    #allocation5 [shape = 'u8[65536]{0}', space=vmem, size = 0x10000, scoped, tag = 'input window, operand 1, single buffered']
    #allocation6 [shape = 's32[1]{0}', space=sflag, size = 0x4, scoped, tag = 'scoped memory for tpu_custom_call.1']
    #allocation7 [shape = 'u8[4096]{0}', space=vmem, size = 0x1000, scoped, tag = 'output window, operand 0, single buffered']
    %7 = vsyncpa [#allocation3], 0
    %8 = vsyncpa [#allocation6], 0
    %9 = vsyncpa [#allocation4], 0
    // Predicated region
    $region2: #{tpu_custom_call.1} parent=1 // pred_check
      _
    $region3: #{tpu_custom_call.1} parent=1 // pred_check_branch
      %11 = sbr.rel (0) target = $region5
    $region4: #{tpu_custom_call.1} parent=1 // pred_region
      %s13 = ssub.s32 128, 128
      %14 = vsyncadd [#allocation3], %s13
      %s16 = sshll.u32 [#allocation2], 4
      %s17 = int_to_ptr.vmem [resolvable:$true] %s16
      %19 = dma.hbm_to_vmem [thread:$0]  %s0, 128, %s17, [#allocation3]
    $region5: #{tpu_custom_call.1} parent=1 // pred_fallthru
      _
    // Predicated region
    $region6: #{tpu_custom_call.1} parent=1 // pred_check
      _
    $region7: #{tpu_custom_call.1} parent=1 // pred_check_branch
      %21 = sbr.rel (0) target = $region9
    $region8: #{tpu_custom_call.1} parent=1 // pred_region
      %s23 = ssub.s32 2048, 128
      %24 = vsyncadd [#allocation6], %s23
      %s25 = sshll.u32 [#allocation5], 4
      %s26 = int_to_ptr.vmem [resolvable:$true] %s25
      %31 = dma.hbm_to_vmem [thread:$0]  %s1, 128, %s26, [#allocation6], 128, 128, 8
    $region9: #{tpu_custom_call.1} parent=1 // pred_fallthru
      _
    // Predicated region
    $region10: #{tpu_custom_call.1} parent=1 // pred_check
      _
    $region11: #{tpu_custom_call.1} parent=1 // pred_check_branch
      %33 = sbr.rel (0) target = $region13
    $region12: #{tpu_custom_call.1} parent=1 // pred_region
      %34 = dma.done [#allocation3], 128
    $region13: #{tpu_custom_call.1} parent=1 // pred_fallthru
      _
    // Predicated region
    $region14: #{tpu_custom_call.1} parent=1 // pred_check
      _
    $region15: #{tpu_custom_call.1} parent=1 // pred_check_branch
      %36 = sbr.rel (0) target = $region17
    $region16: #{tpu_custom_call.1} parent=1 // pred_region
      %37 = dma.done [#allocation6], 2048
    $region17: #{tpu_custom_call.1} parent=1 // pred_fallthru
      _
    %v38 = vld [vmem:[#allocation2] sm:$0xff]
    %v39 = vld [vmem:[#allocation5] sm:$0xff]
    %v40 = vld [vmem:[#allocation5 + $0x8] sm:$0xff]
    %v41 = vld [vmem:[#allocation5 + $0x10] sm:$0xff]
    %v42 = vld [vmem:[#allocation5 + $0x18] sm:$0xff]
    %v43 = vld [vmem:[#allocation5 + $0x20] sm:$0xff]
    %v44 = vld [vmem:[#allocation5 + $0x28] sm:$0xff]
    %v45 = vld [vmem:[#allocation5 + $0x30] sm:$0xff]
    %v46 = vld [vmem:[#allocation5 + $0x38] sm:$0xff]
    %v47 = vld [vmem:[#allocation5 + $0x40] sm:$0xff]
    %v48 = vld [vmem:[#allocation5 + $0x48] sm:$0xff]
    %v49 = vld [vmem:[#allocation5 + $0x50] sm:$0xff]
    %v50 = vld [vmem:[#allocation5 + $0x58] sm:$0xff]
    %v51 = vld [vmem:[#allocation5 + $0x60] sm:$0xff]
    %v52 = vld [vmem:[#allocation5 + $0x68] sm:$0xff]
    %v53 = vld [vmem:[#allocation5 + $0x70] sm:$0xff]
    %v54 = vld [vmem:[#allocation5 + $0x78] sm:$0xff]
    %v55 = vmul.f32 %v38, %v38
    %vm56 = vcmask 261120
    %v57 = vsel %vm56, %v55, 0.0
    %58 = vadd.xlane.f32.xlu0 %v57
    %v59 = vpop.xlane.xlu0 %58
    %v60 = vmul.f32 %v39, %v39
    %v61 = vmul.f32 %v40, %v40
    %v62 = vmul.f32 %v41, %v41
    %v63 = vmul.f32 %v42, %v42
    %v64 = vmul.f32 %v43, %v43
    %v65 = vmul.f32 %v44, %v44
    %v66 = vmul.f32 %v45, %v45
    %v67 = vmul.f32 %v46, %v46
    %v68 = vmul.f32 %v47, %v47
    %v69 = vmul.f32 %v48, %v48
    %v70 = vmul.f32 %v49, %v49
    %v71 = vmul.f32 %v50, %v50
    %v72 = vmul.f32 %v51, %v51
    %v73 = vmul.f32 %v52, %v52
    %v74 = vmul.f32 %v53, %v53
    %v75 = vmul.f32 %v54, %v54
    %v76 = vsel %vm56, %v60, 0.0
    %77 = vadd.xlane.f32.xlu0 %v76
    %v78 = vpop.xlane.xlu0 %77
    %v79 = vsel %vm56, %v61, 0.0
    %80 = vadd.xlane.f32.xlu0 %v79
    %v81 = vpop.xlane.xlu0 %80
    %v82 = vsel %vm56, %v62, 0.0
    %83 = vadd.xlane.f32.xlu0 %v82
    %v84 = vpop.xlane.xlu0 %83
    %v85 = vsel %vm56, %v63, 0.0
    %86 = vadd.xlane.f32.xlu0 %v85
    %v87 = vpop.xlane.xlu0 %86
    %v88 = vsel %vm56, %v64, 0.0
    %89 = vadd.xlane.f32.xlu0 %v88
    %v90 = vpop.xlane.xlu0 %89
    %v91 = vsel %vm56, %v65, 0.0
    %92 = vadd.xlane.f32.xlu0 %v91
    %v93 = vpop.xlane.xlu0 %92
    %v94 = vsel %vm56, %v66, 0.0
    %95 = vadd.xlane.f32.xlu0 %v94
    %v96 = vpop.xlane.xlu0 %95
    %v97 = vsel %vm56, %v67, 0.0
    %98 = vadd.xlane.f32.xlu0 %v97
    %v99 = vpop.xlane.xlu0 %98
    %v100 = vsel %vm56, %v68, 0.0
    %101 = vadd.xlane.f32.xlu0 %v100
    %v102 = vpop.xlane.xlu0 %101
    %v103 = vsel %vm56, %v69, 0.0
    %104 = vadd.xlane.f32.xlu0 %v103
    %v105 = vpop.xlane.xlu0 %104
    %v106 = vsel %vm56, %v70, 0.0
    %107 = vadd.xlane.f32.xlu0 %v106
    %v108 = vpop.xlane.xlu0 %107
    %v109 = vsel %vm56, %v71, 0.0
    %110 = vadd.xlane.f32.xlu0 %v109
    %v111 = vpop.xlane.xlu0 %110
    %v112 = vsel %vm56, %v72, 0.0
    %113 = vadd.xlane.f32.xlu0 %v112
    %v114 = vpop.xlane.xlu0 %113
    %v115 = vsel %vm56, %v73, 0.0
    %116 = vadd.xlane.f32.xlu0 %v115
    %v117 = vpop.xlane.xlu0 %116
    %v118 = vsel %vm56, %v74, 0.0
    %119 = vadd.xlane.f32.xlu0 %v118
    %v120 = vpop.xlane.xlu0 %119
    %v121 = vsel %vm56, %v75, 0.0
    %122 = vadd.xlane.f32.xlu0 %v121
    %v123 = vpop.xlane.xlu0 %122
    %v124 = vmax.f32 %v59, 1e-16
    %v125 = vrsqrt.pop %v124
    %v126 = vmul.f32 %v125, 20.0
    %v127 = vmax.f32 %v78, 1e-16
    %v128 = vmax.f32 %v81, 1e-16
    %v129 = vmax.f32 %v84, 1e-16
    %v130 = vmax.f32 %v87, 1e-16
    %v131 = vmax.f32 %v90, 1e-16
    %v132 = vmax.f32 %v93, 1e-16
    %v133 = vmax.f32 %v96, 1e-16
    %v134 = vmax.f32 %v99, 1e-16
    %v135 = vmax.f32 %v102, 1e-16
    %v136 = vmax.f32 %v105, 1e-16
    %v137 = vmax.f32 %v108, 1e-16
    %v138 = vmax.f32 %v111, 1e-16
    %v139 = vmax.f32 %v114, 1e-16
    %v140 = vmax.f32 %v117, 1e-16
    %v141 = vmax.f32 %v120, 1e-16
    %v142 = vmax.f32 %v123, 1e-16
    %v143 = vrsqrt.pop %v127
    %v144 = vrsqrt.pop %v128
    %v145 = vrsqrt.pop %v129
    %v146 = vrsqrt.pop %v130
    %v147 = vrsqrt.pop %v131
    %v148 = vrsqrt.pop %v132
    %v149 = vrsqrt.pop %v133
    %v150 = vrsqrt.pop %v134
    %v151 = vrsqrt.pop %v135
    %v152 = vrsqrt.pop %v136
    %v153 = vrsqrt.pop %v137
    %v154 = vrsqrt.pop %v138
    %v155 = vrsqrt.pop %v139
    %v156 = vrsqrt.pop %v140
    %v157 = vrsqrt.pop %v141
    %v158 = vrsqrt.pop %v142
    %v159 = vmul.f32 %v38, %v126
    %v160 = vmul.f32 %v39, %v143
    %v161 = vmul.f32 %v40, %v144
    %v162 = vmul.f32 %v41, %v145
    %v163 = vmul.f32 %v42, %v146
    %v164 = vmul.f32 %v43, %v147
    %v165 = vmul.f32 %v44, %v148
    %v166 = vmul.f32 %v45, %v149
    %v167 = vmul.f32 %v46, %v150
    %v168 = vmul.f32 %v47, %v151
    %v169 = vmul.f32 %v48, %v152
    %v170 = vmul.f32 %v49, %v153
    %v171 = vmul.f32 %v50, %v154
    %v172 = vmul.f32 %v51, %v155
    %v173 = vmul.f32 %v52, %v156
    %v174 = vmul.f32 %v53, %v157
    %v175 = vmul.f32 %v54, %v158
    %v177 = vsel %vm56, %v159, 0
    %v180 = vsel %vm56, %v160, 0
    %v183 = vsel %vm56, %v161, 0
    %v186 = vsel %vm56, %v162, 0
    %v189 = vsel %vm56, %v163, 0
    %v192 = vsel %vm56, %v164, 0
    %v195 = vsel %vm56, %v165, 0
    %v198 = vsel %vm56, %v166, 0
    %v201 = vsel %vm56, %v167, 0
    %v204 = vsel %vm56, %v168, 0
    %v207 = vsel %vm56, %v169, 0
    %v210 = vsel %vm56, %v170, 0
    %v213 = vsel %vm56, %v171, 0
    %v216 = vsel %vm56, %v172, 0
    %v219 = vsel %vm56, %v173, 0
    %v222 = vsel %vm56, %v174, 0
    %v225 = vsel %vm56, %v175, 0
    %227 = vmatprep.subr.mxu0 0.0
    %228 = vmatpush1.xpose.msra.mxu0 %v225
    %229 = vmatprep.subr.mxu0 0.0
    %230 = vmatpush1.xpose.msra.mxu0 %v222
    %231 = vmatprep.subr.mxu0 0.0
    %232 = vmatpush1.xpose.msra.mxu0 %v219
    %233 = vmatprep.subr.mxu0 0.0
    %234 = vmatpush1.xpose.msra.mxu0 %v216
    %235 = vmatprep.subr.mxu0 0.0
    %236 = vmatpush1.xpose.msra.mxu0 %v213
    %237 = vmatprep.subr.mxu0 0.0
    %238 = vmatpush1.xpose.msra.mxu0 %v210
    %239 = vmatprep.subr.mxu0 0.0
    %240 = vmatpush1.xpose.msra.mxu0 %v207
    %241 = vmatprep.subr.mxu0 0.0
    %242 = vmatpush1.xpose.msra.mxu0 %v204
    %243 = vmatprep.subr.mxu0 0.0
    %244 = vmatpush1.xpose.msra.mxu0 %v201
    %245 = vmatprep.subr.mxu0 0.0
    %246 = vmatpush1.xpose.msra.mxu0 %v198
    %247 = vmatprep.subr.mxu0 0.0
    %248 = vmatpush1.xpose.msra.mxu0 %v195
    %249 = vmatprep.subr.mxu0 0.0
    %250 = vmatpush1.xpose.msra.mxu0 %v192
    %251 = vmatprep.subr.mxu0 0.0
    %252 = vmatpush1.xpose.msra.mxu0 %v189
    %253 = vmatprep.subr.mxu0 0.0
    %254 = vmatpush1.xpose.msra.mxu0 %v186
    %255 = vmatprep.subr.mxu0 0.0
    %256 = vmatpush1.xpose.msra.mxu0 %v183
    %257 = vmatprep.subr.mxu0 0.0
    %258 = vmatpush1.xpose.msra.mxu0 %v180
    %259 = vmatprep.subr.mxu0 0.0
    %260 = vmatpush2.xpose.msra.mxu0 0.0
    %261 = vmatprep.subr.mxu0 0.0
    %262 = vmatpush2.xpose.msra.mxu0 0.0
    %263 = vmatprep.subr.mxu0 0.0
    %264 = vmatpush2.xpose.msra.mxu0 0.0
    %265 = vmatprep.subr.mxu0 0.0
    %266 = vmatpush2.xpose.msra.mxu0 0.0
    %267 = vmatprep.subr.mxu0 0.0
    %268 = vmatpush2.xpose.msra.mxu0 0.0
    %269 = vmatprep.subr.mxu0 0.0
    %270 = vmatpush2.xpose.msra.mxu0 0.0
    %271 = vmatprep.subr.mxu0 0.0
    %272 = vmatpush2.xpose.msra.mxu0 0.0
    %273 = vmatprep.subr.mxu0 0.0
    %274 = vmatpush2.xpose.msra.mxu0 0.0
    %275 = vmatprep.subr.mxu0 0.0
    %276 = vmatpush2.xpose.msra.mxu0 0.0
    %277 = vmatprep.subr.mxu0 0.0
    %278 = vmatpush2.xpose.msra.mxu0 0.0
    %279 = vmatprep.subr.mxu0 0.0
    %280 = vmatpush2.xpose.msra.mxu0 0.0
    %281 = vmatprep.subr.mxu0 0.0
    %282 = vmatpush2.xpose.msra.mxu0 0.0
    %283 = vmatprep.subr.mxu0 0.0
    %284 = vmatpush2.xpose.msra.mxu0 0.0
    %285 = vmatprep.subr.mxu0 0.0
    %286 = vmatpush2.xpose.msra.mxu0 0.0
    %287 = vmatprep.subr.mxu0 0.0
    %288 = vmatpush2.xpose.msra.mxu0 0.0
    %289 = vmatprep.subr.mxu0 0.0
    %290 = vmatpush2.xpose.msra.mxu0 0.0
    %291 = vmatprep.mubr.f32.mxu0 0.0
    %292 = vmatmul.mubr.f32.gmra.mxu0 %v177
    %v293 = vpop.f32.mrf.mxu0
    %v294 = vadd.f32 0.0, %v293
    %v295 = vpop.f32.mrf.mxu0
    %296 = vdwg.mxu0
    %297 = vst [vmem:[#allocation7] sm:$0xff] %v294
    // Predicated region
    $region18: #{tpu_custom_call.1} parent=1 // pred_check
      _
    $region19: #{tpu_custom_call.1} parent=1 // pred_check_branch
      %299 = sbr.rel (0) target = $region21
    $region20: #{tpu_custom_call.1} parent=1 // pred_region
      %s301 = ssub.s32 128, 128
      %302 = vsyncadd [#allocation4], %s301
      %s304 = sshll.u32 [#allocation7], 4
      %s305 = int_to_ptr.vmem [resolvable:$true] %s304
      %307 = dma.vmem_to_hbm [thread:$0]  %s305, 128, %s2, [#allocation4]
    $region21: #{tpu_custom_call.1} parent=1 // pred_fallthru
      _
    // Predicated region
    $region22: #{tpu_custom_call.1} parent=1 // pred_check
      _
    $region23: #{tpu_custom_call.1} parent=1 // pred_check_branch
      %309 = sbr.rel (0) target = $region25
    $region24: #{tpu_custom_call.1} parent=1 // pred_region
      %310 = dma.done [#allocation4], 128
    $region25: #{tpu_custom_call.1} parent=1 // pred_fallthru
      _
    %311 = vsyncpa [#allocation3], 1
    %312 = vsyncpa [#allocation6], 1
    %313 = vsyncpa [#allocation4], 1

</llo_original>
